<compile_context>
chip_gen: v7x
topology: tpu7x:2x2x1
jax: 0.10.0
libtpu: 0.0.40
codegen_flags: <defaults>
</compile_context>

<pallas_src>
import functools
import math

import jax
import jax.numpy as jnp
import numpy as np
from jax.experimental import pallas as pl
from jax.experimental.pallas import tpu as pltpu


def _cntk_kernel(zn_ref, zt_ref, wc_ref, s1e_ref, s2f_ref, t_ref,
                 nngp_ref, conv_ref, *, m1):
    zn = zn_ref[...]                                                    # (bn, d)
    zt = zt_ref[...]                                                    # (bn, d)

    # Fused AcosFeatureMap matmul:  zn @ [W1*norm1 | W0]  -> (bn, m1 + m0)
    xwc = jnp.dot(zn, wc_ref[...], preferred_element_type=jnp.float32)

    # order=1 feature map:  (|x|+x)*(norm1/2) == relu(x*norm1); norm1 folded in.
    nngp_ref[...] = jnp.maximum(xwc[:, :m1], 0.0).astype(nngp_ref.dtype)

    # order=0 feature map as a >0 gate; norm0 is folded into the (row-zero-padded)
    # expanded sketch matrix, so the W1 half of the gate contributes nothing.
    gate = (xwc > 0.0).astype(jnp.float32)                              # (bn, m1+m0)
    ye = jnp.dot(gate, s2f_ref[...], preferred_element_type=jnp.float32)  # (bn, m^2)

    # Count-sketch of z_ntk, expanded along the shift axis.
    xe = jnp.dot(zt, s1e_ref[...], preferred_element_type=jnp.float32)    # (bn, m^2)

    # Circular convolution == ifft(fft(x_cs)*fft(y_cs)).real, computed exactly
    # as a lane-dense outer-product contraction on the MXU.
    conv_ref[...] = jnp.dot(xe * ye, t_ref[...],
                            preferred_element_type=jnp.float32).astype(conv_ref.dtype)


def cntk_feature_map_forward(z_nngp, z_ntk, W0, W1, S1, S2, *, m0, m1, m_cs):
    """Returns (z_nngp_out, z_ntk_out) like CntkFeatureMapOps.forward (concat=True)."""
    n, d_in = z_nngp.shape
    norm0 = math.sqrt(2.0 / m0)
    norm1 = math.sqrt(2.0 / m1)
    m2 = m_cs * m_cs

    # --- one-time parameter prep (plain JAX glue, outside the kernel) ---------
    # Fused Acos weights with norm1 folded in (norm1 = 0.25 here, exact).
    Wc = jnp.concatenate([W1 * norm1, W0], axis=1)                     # (d, m1+m0)
    # Expanded sketches:  S1E[:, j*m+l] = S1[:, j],  S2F[:, j*m+l] = S2[:, l].
    S1E = jnp.repeat(S1, m_cs, axis=1)                                 # (d, m^2)
    S2F = jnp.concatenate(
        [jnp.zeros((m1, m2), jnp.float32),                             # zero rows: W1 gate half
         norm0 * jnp.tile(S2, (1, m_cs))], axis=0)                     # (m1+m0, m^2)
    # Circular-convolution contraction matrix: T[j*m+l, k] = [(j+l) mod m == k].
    p = jnp.arange(m2)
    T = jax.nn.one_hot((p // m_cs + p % m_cs) % m_cs, m_cs, dtype=jnp.float32)

    # --- grid over batch; weights stay resident (constant block index) --------
    bn = 128 if n % 128 == 0 else n
    grid = (n // bn,)

    kernel = functools.partial(_cntk_kernel, m1=m1)
    nngp, conv = pl.pallas_call(
        kernel,
        out_shape=(jax.ShapeDtypeStruct((n, m1), jnp.float32),
                   jax.ShapeDtypeStruct((n, m_cs), jnp.float32)),
        grid=grid,
        in_specs=[
            pl.BlockSpec((bn, d_in), lambda i: (i, 0)),        # z_nngp (streamed)
            pl.BlockSpec((bn, d_in), lambda i: (i, 0)),        # z_ntk  (streamed)
            pl.BlockSpec((d_in, m1 + m0), lambda i: (0, 0)),   # Wc     (resident)
            pl.BlockSpec((d_in, m2), lambda i: (0, 0)),        # S1E    (resident)
            pl.BlockSpec((m1 + m0, m2), lambda i: (0, 0)),     # S2F    (resident)
            pl.BlockSpec((m2, m_cs), lambda i: (0, 0)),        # T      (resident)
        ],
        out_specs=(pl.BlockSpec((bn, m1), lambda i: (i, 0)),
                   pl.BlockSpec((bn, m_cs), lambda i: (i, 0))),
        compiler_params=pltpu.CompilerParams(
            dimension_semantics=("parallel",)),
    )(z_nngp, z_ntk, Wc, S1E, S2F, T)

    # concat=True path of the module, done lane-dense in the wrapper.
    z_ntk_out = jnp.concatenate([nngp, conv], axis=1)
    return nngp, z_ntk_out


if __name__ == "__main__":
    # Module hyper-params (small, consistent with the PyTorch __init__).
    num_layers, stride, C = 1, 2, 4
    m1, m0, m_cs = 32, 32, 32
    input_dim = stride ** 2 * C          # 16
    n = 8                                # batch

    key = jax.random.PRNGKey(0)
    ks = jax.random.split(key, 8)

    # Inputs for layer_idx = 0.
    z_nngp = jax.random.normal(ks[0], (n, input_dim), jnp.float32)
    z_ntk = jax.random.normal(ks[1], (n, input_dim), jnp.float32)

    # Deterministic parameters (torch.randn / torch.randint equivalents).
    W0 = jax.random.normal(ks[2], (input_dim, m0), jnp.float32)      # arccos0[0].W
    W1 = jax.random.normal(ks[3], (input_dim, m1), jnp.float32)      # arccos1[0].W
    sign1 = (jax.random.randint(ks[4], (input_dim,), 0, 2) * 2 - 1).astype(jnp.float32)
    indx1 = jax.random.randint(ks[5], (input_dim,), 0, m_cs)
    sign2 = (jax.random.randint(ks[6], (m0,), 0, 2) * 2 - 1).astype(jnp.float32)
    indx2 = jax.random.randint(ks[7], (m0,), 0, m_cs)

    # Dense count-sketch matrices: S[j, indx[j]] = sign[j]  (glue, plain JAX).
    S1 = jax.nn.one_hot(indx1, m_cs, dtype=jnp.float32) * sign1[:, None]
    S2 = jax.nn.one_hot(indx2, m_cs, dtype=jnp.float32) * sign2[:, None]

    nngp_out, ntk_out = cntk_feature_map_forward(
        z_nngp, z_ntk, W0, W1, S1, S2, m0=m0, m1=m1, m_cs=m_cs)
    jax.block_until_ready((nngp_out, ntk_out))

    # Pure-numpy reference (uses FFT, matching the PyTorch semantics).
    zn, zt = np.asarray(z_nngp), np.asarray(z_ntk)
    W0n, W1n, S1n, S2n = map(np.asarray, (W0, W1, S1, S2))
    norm0 = math.sqrt(2.0 / m0)
    norm1 = math.sqrt(2.0 / m1)
    xw0 = zn @ W0n
    tmp = (xw0 > 0).astype(np.float32) * norm0
    xw1 = zn @ W1n
    nngp_ref = (np.abs(xw1) + xw1) * (norm1 / 2.0)
    x_cs = zt @ S1n
    y_cs = tmp @ S2n
    conv_ref = np.real(np.fft.ifft(np.fft.fft(x_cs, axis=-1) * np.fft.fft(y_cs, axis=-1), axis=-1))
    ntk_ref = np.concatenate([nngp_ref, conv_ref], axis=1).astype(np.float32)

    np.testing.assert_allclose(np.asarray(nngp_out), nngp_ref, rtol=1e-2, atol=1e-2)
    np.testing.assert_allclose(np.asarray(ntk_out), ntk_ref, rtol=1e-2, atol=1e-2)
    print("KERNEL_OK")
</pallas_src>

<mosaic_0001>
module attributes {stable_mosaic.version = 11 : i64} {
  func.func @_cntk_kernel(%arg0: i32, %arg1: memref<8x16xf32, #tpu.memory_space<vmem>>, %arg2: memref<8x16xf32, #tpu.memory_space<vmem>>, %arg3: memref<16x64xf32, #tpu.memory_space<vmem>>, %arg4: memref<16x1024xf32, #tpu.memory_space<vmem>>, %arg5: memref<64x1024xf32, #tpu.memory_space<vmem>>, %arg6: memref<1024x32xf32, #tpu.memory_space<vmem>>, %arg7: memref<8x32xf32, #tpu.memory_space<vmem>>, %arg8: memref<8x32xf32, #tpu.memory_space<vmem>>) attributes {dimension_semantics = [#tpu.dimension_semantics<parallel>], iteration_bounds = array<i64: 1>, scalar_prefetch = 0 : i64, scratch_operands = 0 : i64, tpu.core_type = #tpu.core_type<tc>, window_params = [{transform_indices = @transform_0, window_bounds = array<i64: 8, 16>}, {transform_indices = @transform_1, window_bounds = array<i64: 8, 16>}, {pipeline_mode = #tpu.pipeline_mode<synchronous>, transform_indices = @transform_2, window_bounds = array<i64: 16, 64>}, {pipeline_mode = #tpu.pipeline_mode<synchronous>, transform_indices = @transform_3, window_bounds = array<i64: 16, 1024>}, {pipeline_mode = #tpu.pipeline_mode<synchronous>, transform_indices = @transform_4, window_bounds = array<i64: 64, 1024>}, {pipeline_mode = #tpu.pipeline_mode<synchronous>, transform_indices = @transform_5, window_bounds = array<i64: 1024, 32>}, {transform_indices = @transform_6, window_bounds = array<i64: 8, 32>}, {transform_indices = @transform_7, window_bounds = array<i64: 8, 32>}]} {
    %c0 = arith.constant 0 : index
    %c0_0 = arith.constant 0 : index
    %0 = vector.load %arg1[%c0, %c0_0] : memref<8x16xf32, #tpu.memory_space<vmem>>, vector<8x16xf32>
    %c0_1 = arith.constant 0 : index
    %c0_2 = arith.constant 0 : index
    %1 = vector.load %arg2[%c0_1, %c0_2] : memref<8x16xf32, #tpu.memory_space<vmem>>, vector<8x16xf32>
    %c0_3 = arith.constant 0 : index
    %c0_4 = arith.constant 0 : index
    %2 = vector.load %arg3[%c0_3, %c0_4] : memref<16x64xf32, #tpu.memory_space<vmem>>, vector<16x64xf32>
    %cst = arith.constant dense<0.000000e+00> : vector<8x64xf32>
    %3 = tpu.matmul %0, %2, %cst {dimension_numbers = #tpu.dot_dimension_numbers<[1], [0], [0], [1], [0, 0, 1, 1], [], []>} : vector<8x16xf32>, vector<16x64xf32>, vector<8x64xf32> -> vector<8x64xf32>
    %4 = vector.extract_strided_slice %3 {offsets = [0, 0], sizes = [8, 32], strides = [1, 1]} : vector<8x64xf32> to vector<8x32xf32>
    %cst_5 = arith.constant 0.000000e+00 : f32
    %5 = vector.broadcast %cst_5 : f32 to vector<8x32xf32>
    %6 = arith.maximumf %4, %5 : vector<8x32xf32>
    %c0_6 = arith.constant 0 : index
    %c0_7 = arith.constant 0 : index
    %7 = vector.load %arg7[%c0_6, %c0_7] : memref<8x32xf32, #tpu.memory_space<vmem>>, vector<8x32xf32>
    tpu.vector_store %arg7[%c0_6, %c0_7], %6 {strides = array<i32>} : memref<8x32xf32, #tpu.memory_space<vmem>>, vector<8x32xf32>,
    %cst_8 = arith.constant 0.000000e+00 : f32
    %8 = vector.broadcast %cst_8 : f32 to vector<8x64xf32>
    %9 = arith.cmpf ogt, %3, %8 : vector<8x64xf32>
    %10 = arith.extui %9 : vector<8x64xi1> to vector<8x64xi32>
    %11 = arith.sitofp %10 : vector<8x64xi32> to vector<8x64xf32>
    %c0_9 = arith.constant 0 : index
    %c0_10 = arith.constant 0 : index
    %12 = vector.load %arg5[%c0_9, %c0_10] : memref<64x1024xf32, #tpu.memory_space<vmem>>, vector<64x1024xf32>
    %cst_11 = arith.constant dense<0.000000e+00> : vector<8x1024xf32>
    %13 = tpu.matmul %11, %12, %cst_11 {dimension_numbers = #tpu.dot_dimension_numbers<[1], [0], [0], [1], [0, 0, 1, 1], [], []>} : vector<8x64xf32>, vector<64x1024xf32>, vector<8x1024xf32> -> vector<8x1024xf32>
    %c0_12 = arith.constant 0 : index
    %c0_13 = arith.constant 0 : index
    %14 = vector.load %arg4[%c0_12, %c0_13] : memref<16x1024xf32, #tpu.memory_space<vmem>>, vector<16x1024xf32>
    %cst_14 = arith.constant dense<0.000000e+00> : vector<8x1024xf32>
    %15 = tpu.matmul %1, %14, %cst_14 {dimension_numbers = #tpu.dot_dimension_numbers<[1], [0], [0], [1], [0, 0, 1, 1], [], []>} : vector<8x16xf32>, vector<16x1024xf32>, vector<8x1024xf32> -> vector<8x1024xf32>
    %16 = arith.mulf %15, %13 : vector<8x1024xf32>
    %c0_15 = arith.constant 0 : index
    %c0_16 = arith.constant 0 : index
    %17 = vector.load %arg6[%c0_15, %c0_16] : memref<1024x32xf32, #tpu.memory_space<vmem>>, vector<1024x32xf32>
    %cst_17 = arith.constant dense<0.000000e+00> : vector<8x32xf32>
    %18 = tpu.matmul %16, %17, %cst_17 {dimension_numbers = #tpu.dot_dimension_numbers<[1], [0], [0], [1], [0, 0, 1, 1], [], []>} : vector<8x1024xf32>, vector<1024x32xf32>, vector<8x32xf32> -> vector<8x32xf32>
    %c0_18 = arith.constant 0 : index
    %c0_19 = arith.constant 0 : index
    %19 = vector.load %arg8[%c0_18, %c0_19] : memref<8x32xf32, #tpu.memory_space<vmem>>, vector<8x32xf32>
    tpu.vector_store %arg8[%c0_18, %c0_19], %18 {strides = array<i32>} : memref<8x32xf32, #tpu.memory_space<vmem>>, vector<8x32xf32>,
    return
  }
  func.func @transform_0(%arg0: i32) -> (i32, i32) {
    %c0_i32 = arith.constant 0 : i32
    %c0_i32_0 = arith.constant 0 : i32
    return %arg0, %c0_i32 : i32, i32
  }
  func.func @transform_1(%arg0: i32) -> (i32, i32) {
    %c0_i32 = arith.constant 0 : i32
    %c0_i32_0 = arith.constant 0 : i32
    return %arg0, %c0_i32 : i32, i32
  }
  func.func @transform_2(%arg0: i32) -> (i32, i32) {
    %c0_i32 = arith.constant 0 : i32
    %c0_i32_0 = arith.constant 0 : i32
    %c0_i32_1 = arith.constant 0 : i32
    return %c0_i32, %c0_i32_0 : i32, i32
  }
  func.func @transform_3(%arg0: i32) -> (i32, i32) {
    %c0_i32 = arith.constant 0 : i32
    %c0_i32_0 = arith.constant 0 : i32
    %c0_i32_1 = arith.constant 0 : i32
    return %c0_i32, %c0_i32_0 : i32, i32
  }
  func.func @transform_4(%arg0: i32) -> (i32, i32) {
    %c0_i32 = arith.constant 0 : i32
    %c0_i32_0 = arith.constant 0 : i32
    %c0_i32_1 = arith.constant 0 : i32
    return %c0_i32, %c0_i32_0 : i32, i32
  }
  func.func @transform_5(%arg0: i32) -> (i32, i32) {
    %c0_i32 = arith.constant 0 : i32
    %c0_i32_0 = arith.constant 0 : i32
    %c0_i32_1 = arith.constant 0 : i32
    return %c0_i32, %c0_i32_0 : i32, i32
  }
  func.func @transform_6(%arg0: i32) -> (i32, i32) {
    %c0_i32 = arith.constant 0 : i32
    %c0_i32_0 = arith.constant 0 : i32
    return %arg0, %c0_i32 : i32, i32
  }
  func.func @transform_7(%arg0: i32) -> (i32, i32) {
    %c0_i32 = arith.constant 0 : i32
    %c0_i32_0 = arith.constant 0 : i32
    return %arg0, %c0_i32 : i32, i32
  }
}

</mosaic_0001>

<llo_original>
// kernel: tpu_custom_call.1
$region0: #{tpu_custom_call.1}
  #allocation0 [shape = 'u32[]', space=smem, size = 0x4, offset = 0x4, fixed_abs, tag = 'smem constant byte address 0x4 - core index']
  #allocation1 [shape = 'u32[144,128]{1,0:T(1,128)}', space=vmem, size = 0x12000, scoped, tag = 'internal scratch']
  %s0 = inlined_call_operand.vmem [shape: f32[8,16], index: 0, kind: input, shape index: {}]
  %s1 = inlined_call_operand.vmem [shape: f32[8,16], index: 1, kind: input, shape index: {}]
  %s2 = inlined_call_operand.vmem [shape: f32[16,64], index: 2, kind: input, shape index: {}]
  %s3 = inlined_call_operand.vmem [shape: f32[16,1024], index: 3, kind: input, shape index: {}]
  %s4 = inlined_call_operand.vmem [shape: f32[64,1024], index: 4, kind: input, shape index: {}]
  %s5 = inlined_call_operand.vmem [shape: f32[1024,32], index: 5, kind: input, shape index: {}]
  %s6 = inlined_call_operand.hbm [shape: f32[8,32], index: 6, kind: output, shape index: {0}]
  %s7 = inlined_call_operand.hbm [shape: f32[8,32], index: 7, kind: output, shape index: {1}]
  %8 = xla_tuple %s6, %s7
  %s9 = sld [smem:[#allocation0]]
  $region42: #{tpu_custom_call.1} parent=0
    _
  %s11 = ssub.s32 1, %s9
  %s12 = scalar_select 0, %s11, %s9
  $region1: #{tpu_custom_call.1} parent=0
    #allocation2 [shape = 'u8[4096]{0}', space=vmem, size = 0x1000, scoped, tag = 'output window, operand 0, single buffered']
    #allocation3 [shape = 's32[1]{0}', space=sflag, size = 0x4, scoped, tag = 'scoped memory for tpu_custom_call.1']
    #allocation4 [shape = 'u8[4096]{0}', space=vmem, size = 0x1000, scoped, tag = 'output window, operand 1, single buffered']
    #allocation5 [shape = 's32[1]{0}', space=sflag, size = 0x4, scoped, tag = 'scoped memory for tpu_custom_call.1']
    %13 = vsyncpa [#allocation3], 0
    %14 = vsyncpa [#allocation5], 0
    // Predicated region
    $region2: #{tpu_custom_call.1} parent=1 // pred_check
      _
    $region3: #{tpu_custom_call.1} parent=1 // pred_check_branch
      %16 = sbr.rel (0) target = $region5
    $region4: #{tpu_custom_call.1} parent=1 // pred_region
      _
    $region5: #{tpu_custom_call.1} parent=1 // pred_fallthru
      _
    // Predicated region
    $region6: #{tpu_custom_call.1} parent=1 // pred_check
      _
    $region7: #{tpu_custom_call.1} parent=1 // pred_check_branch
      %18 = sbr.rel (0) target = $region9
    $region8: #{tpu_custom_call.1} parent=1 // pred_region
      _
    $region9: #{tpu_custom_call.1} parent=1 // pred_fallthru
      _
    // Predicated region
    $region10: #{tpu_custom_call.1} parent=1 // pred_check
      _
    $region11: #{tpu_custom_call.1} parent=1 // pred_check_branch
      %20 = sbr.rel (0) target = $region13
    $region12: #{tpu_custom_call.1} parent=1 // pred_region
      _
    $region13: #{tpu_custom_call.1} parent=1 // pred_fallthru
      _
    // Predicated region
    $region14: #{tpu_custom_call.1} parent=1 // pred_check
      _
    $region15: #{tpu_custom_call.1} parent=1 // pred_check_branch
      %22 = sbr.rel (0) target = $region17
    $region16: #{tpu_custom_call.1} parent=1 // pred_region
      _
    $region17: #{tpu_custom_call.1} parent=1 // pred_fallthru
      _
    // Predicated region
    $region18: #{tpu_custom_call.1} parent=1 // pred_check
      _
    $region19: #{tpu_custom_call.1} parent=1 // pred_check_branch
      %24 = sbr.rel (0) target = $region21
    $region20: #{tpu_custom_call.1} parent=1 // pred_region
      _
    $region21: #{tpu_custom_call.1} parent=1 // pred_fallthru
      _
    // Predicated region
    $region22: #{tpu_custom_call.1} parent=1 // pred_check
      _
    $region23: #{tpu_custom_call.1} parent=1 // pred_check_branch
      %26 = sbr.rel (0) target = $region25
    $region24: #{tpu_custom_call.1} parent=1 // pred_region
      _
    $region25: #{tpu_custom_call.1} parent=1 // pred_fallthru
      _
    %v27 = vld [vmem:[%s0] sm:$0xff]
    %v28 = vld [vmem:[%s1] sm:$0xff]
    %v29 = vld [vmem:[%s2] sm:$0xff]
    %v30 = vld [vmem:[%s2 + $0x8] sm:$0xff]
    %vm31 = vcmask 130048
    %v33 = vsel %vm31, %v27, 0
    %35 = vmatprep.subr.mxu0 0.0
    %36 = vmatpush1.msra.mxu0 %v29
    %37 = vmatprep.subr.mxu0 0.0
    %38 = vmatpush1.msra.mxu0 %v30
    %39 = vmatprep.subr.mxu0 0.0
    %40 = vmatpush1.msra.mxu0 0.0
    %41 = vmatprep.subr.mxu0 0.0
    %42 = vmatpush1.msra.mxu0 0.0
    %43 = vmatprep.subr.mxu0 0.0
    %44 = vmatpush1.msra.mxu0 0.0
    %45 = vmatprep.subr.mxu0 0.0
    %46 = vmatpush1.msra.mxu0 0.0
    %47 = vmatprep.subr.mxu0 0.0
    %48 = vmatpush1.msra.mxu0 0.0
    %49 = vmatprep.subr.mxu0 0.0
    %50 = vmatpush1.msra.mxu0 0.0
    %51 = vmatprep.subr.mxu0 0.0
    %52 = vmatpush1.msra.mxu0 0.0
    %53 = vmatprep.subr.mxu0 0.0
    %54 = vmatpush1.msra.mxu0 0.0
    %55 = vmatprep.subr.mxu0 0.0
    %56 = vmatpush1.msra.mxu0 0.0
    %57 = vmatprep.subr.mxu0 0.0
    %58 = vmatpush1.msra.mxu0 0.0
    %59 = vmatprep.subr.mxu0 0.0
    %60 = vmatpush1.msra.mxu0 0.0
    %61 = vmatprep.subr.mxu0 0.0
    %62 = vmatpush1.msra.mxu0 0.0
    %63 = vmatprep.subr.mxu0 0.0
    %64 = vmatpush1.msra.mxu0 0.0
    %65 = vmatprep.subr.mxu0 0.0
    %66 = vmatpush1.msra.mxu0 0.0
    %67 = vmatprep.subr.mxu0 0.0
    %68 = vmatpush1.msra.mxu0 0.0
    %69 = vmatprep.subr.mxu0 0.0
    %70 = vmatpush1.msra.mxu0 0.0
    %71 = vmatprep.subr.mxu0 0.0
    %72 = vmatpush1.msra.mxu0 0.0
    %73 = vmatprep.subr.mxu0 0.0
    %74 = vmatpush1.msra.mxu0 0.0
    %75 = vmatprep.subr.mxu0 0.0
    %76 = vmatpush1.msra.mxu0 0.0
    %77 = vmatprep.subr.mxu0 0.0
    %78 = vmatpush1.msra.mxu0 0.0
    %79 = vmatprep.subr.mxu0 0.0
    %80 = vmatpush1.msra.mxu0 0.0
    %81 = vmatprep.subr.mxu0 0.0
    %82 = vmatpush1.msra.mxu0 0.0
    %83 = vmatprep.subr.mxu0 0.0
    %84 = vmatpush1.msra.mxu0 0.0
    %85 = vmatprep.subr.mxu0 0.0
    %86 = vmatpush1.msra.mxu0 0.0
    %87 = vmatprep.subr.mxu0 0.0
    %88 = vmatpush1.msra.mxu0 0.0
    %89 = vmatprep.subr.mxu0 0.0
    %90 = vmatpush1.msra.mxu0 0.0
    %91 = vmatprep.subr.mxu0 0.0
    %92 = vmatpush1.msra.mxu0 0.0
    %93 = vmatprep.subr.mxu0 0.0
    %94 = vmatpush1.msra.mxu0 0.0
    %95 = vmatprep.subr.mxu0 0.0
    %96 = vmatpush1.msra.mxu0 0.0
    %97 = vmatprep.subr.mxu0 0.0
    %98 = vmatpush1.msra.mxu0 0.0
    %99 = vmatprep.mubr.f32.mxu0 0.0
    %100 = vmatmul.mubr.f32.gmra.mrb[0].mxu0 %v33
    %v101 = vpop.f32.mrb[0].mxu0
    %v102 = vadd.f32 0.0, %v101
    %v103 = vpop.f32.mrb[0].mxu0
    %104 = vdwg.mxu0
    %v105 = vmax.f32 %v102, 0.0
    %vm106 = vcmask 261120
    %107 = vst.msk [vmem:[#allocation2] sm:$0xff] %vm106, %v105
    %vm108 = vcmp.gt.f32.partialorder %v102, 0.0
    %v109 = vsel %vm108, 1, 0
    %v110 = vcvt.s32.f32 %v109
    %v111 = vld [vmem:[%s4] sm:$0xff]
    %v112 = vld [vmem:[%s4 + $0x8] sm:$0xff]
    %v113 = vld [vmem:[%s4 + $0x10] sm:$0xff]
    %v114 = vld [vmem:[%s4 + $0x18] sm:$0xff]
    %v115 = vld [vmem:[%s4 + $0x20] sm:$0xff]
    %v116 = vld [vmem:[%s4 + $0x28] sm:$0xff]
    %v117 = vld [vmem:[%s4 + $0x30] sm:$0xff]
    %v118 = vld [vmem:[%s4 + $0x38] sm:$0xff]
    %v119 = vld [vmem:[%s4 + $0x40] sm:$0xff]
    %v120 = vld [vmem:[%s4 + $0x48] sm:$0xff]
    %v121 = vld [vmem:[%s4 + $0x50] sm:$0xff]
    %v122 = vld [vmem:[%s4 + $0x58] sm:$0xff]
    %v123 = vld [vmem:[%s4 + $0x60] sm:$0xff]
    %v124 = vld [vmem:[%s4 + $0x68] sm:$0xff]
    %v125 = vld [vmem:[%s4 + $0x70] sm:$0xff]
    %v126 = vld [vmem:[%s4 + $0x78] sm:$0xff]
    %v127 = vld [vmem:[%s4 + $0x80] sm:$0xff]
    %v128 = vld [vmem:[%s4 + $0x88] sm:$0xff]
    %v129 = vld [vmem:[%s4 + $0x90] sm:$0xff]
    %v130 = vld [vmem:[%s4 + $0x98] sm:$0xff]
    %v131 = vld [vmem:[%s4 + $0xa0] sm:$0xff]
    %v132 = vld [vmem:[%s4 + $0xa8] sm:$0xff]
    %v133 = vld [vmem:[%s4 + $0xb0] sm:$0xff]
    %v134 = vld [vmem:[%s4 + $0xb8] sm:$0xff]
    %v135 = vld [vmem:[%s4 + $0xc0] sm:$0xff]
    %v136 = vld [vmem:[%s4 + $0xc8] sm:$0xff]
    %v137 = vld [vmem:[%s4 + $0xd0] sm:$0xff]
    %v138 = vld [vmem:[%s4 + $0xd8] sm:$0xff]
    %v139 = vld [vmem:[%s4 + $0xe0] sm:$0xff]
    %v140 = vld [vmem:[%s4 + $0xe8] sm:$0xff]
    %v141 = vld [vmem:[%s4 + $0xf0] sm:$0xff]
    %v142 = vld [vmem:[%s4 + $0xf8] sm:$0xff]
    %v143 = vld [vmem:[%s4 + $0x100] sm:$0xff]
    %v144 = vld [vmem:[%s4 + $0x108] sm:$0xff]
    %v145 = vld [vmem:[%s4 + $0x110] sm:$0xff]
    %v146 = vld [vmem:[%s4 + $0x118] sm:$0xff]
    %v147 = vld [vmem:[%s4 + $0x120] sm:$0xff]
    %v148 = vld [vmem:[%s4 + $0x128] sm:$0xff]
    %v149 = vld [vmem:[%s4 + $0x130] sm:$0xff]
    %v150 = vld [vmem:[%s4 + $0x138] sm:$0xff]
    %v151 = vld [vmem:[%s4 + $0x140] sm:$0xff]
    %v152 = vld [vmem:[%s4 + $0x148] sm:$0xff]
    %v153 = vld [vmem:[%s4 + $0x150] sm:$0xff]
    %v154 = vld [vmem:[%s4 + $0x158] sm:$0xff]
    %v155 = vld [vmem:[%s4 + $0x160] sm:$0xff]
    %v156 = vld [vmem:[%s4 + $0x168] sm:$0xff]
    %v157 = vld [vmem:[%s4 + $0x170] sm:$0xff]
    %v158 = vld [vmem:[%s4 + $0x178] sm:$0xff]
    %v159 = vld [vmem:[%s4 + $0x180] sm:$0xff]
    %v160 = vld [vmem:[%s4 + $0x188] sm:$0xff]
    %v161 = vld [vmem:[%s4 + $0x190] sm:$0xff]
    %v162 = vld [vmem:[%s4 + $0x198] sm:$0xff]
    %v163 = vld [vmem:[%s4 + $0x1a0] sm:$0xff]
    %v164 = vld [vmem:[%s4 + $0x1a8] sm:$0xff]
    %v165 = vld [vmem:[%s4 + $0x1b0] sm:$0xff]
    %v166 = vld [vmem:[%s4 + $0x1b8] sm:$0xff]
    %v167 = vld [vmem:[%s4 + $0x1c0] sm:$0xff]
    %v168 = vld [vmem:[%s4 + $0x1c8] sm:$0xff]
    %v169 = vld [vmem:[%s4 + $0x1d0] sm:$0xff]
    %v170 = vld [vmem:[%s4 + $0x1d8] sm:$0xff]
    %v171 = vld [vmem:[%s4 + $0x1e0] sm:$0xff]
    %v172 = vld [vmem:[%s4 + $0x1e8] sm:$0xff]
    %v173 = vld [vmem:[%s4 + $0x1f0] sm:$0xff]
    %v174 = vld [vmem:[%s4 + $0x1f8] sm:$0xff]
    %vm175 = vcmask 523264
    %v177 = vsel %vm175, %v110, 0
    %179 = vmatprep.subr.mxu0 %v112
    %180 = vmatpush1.msra.mxu0 %v111
    %181 = vmatprep.subr.mxu0 %v120
    %182 = vmatpush1.msra.mxu0 %v119
    %183 = vmatprep.subr.mxu0 %v128
    %184 = vmatpush1.msra.mxu0 %v127
    %185 = vmatprep.subr.mxu0 %v136
    %186 = vmatpush1.msra.mxu0 %v135
    %187 = vmatprep.subr.mxu0 %v144
    %188 = vmatpush1.msra.mxu0 %v143
    %189 = vmatprep.subr.mxu0 %v152
    %190 = vmatpush1.msra.mxu0 %v151
    %191 = vmatprep.subr.mxu0 %v160
    %192 = vmatpush1.msra.mxu0 %v159
    %193 = vmatprep.subr.mxu0 %v168
    %194 = vmatpush1.msra.mxu0 %v167
    %195 = vmatprep.subr.mxu0 0.0
    %196 = vmatpush1.msra.mxu0 0.0
    %197 = vmatprep.subr.mxu0 0.0
    %198 = vmatpush1.msra.mxu0 0.0
    %199 = vmatprep.subr.mxu0 0.0
    %200 = vmatpush1.msra.mxu0 0.0
    %201 = vmatprep.subr.mxu0 0.0
    %202 = vmatpush1.msra.mxu0 0.0
    %203 = vmatprep.subr.mxu0 0.0
    %204 = vmatpush1.msra.mxu0 0.0
    %205 = vmatprep.subr.mxu0 0.0
    %206 = vmatpush1.msra.mxu0 0.0
    %207 = vmatprep.subr.mxu0 0.0
    %208 = vmatpush1.msra.mxu0 0.0
    %209 = vmatprep.subr.mxu0 0.0
    %210 = vmatpush1.msra.mxu0 0.0
    %211 = vmatprep.subr.mxu0 0.0
    %212 = vmatpush1.msra.mxu0 0.0
    %213 = vmatprep.subr.mxu0 0.0
    %214 = vmatpush1.msra.mxu0 0.0
    %215 = vmatprep.subr.mxu0 0.0
    %216 = vmatpush1.msra.mxu0 0.0
    %217 = vmatprep.subr.mxu0 0.0
    %218 = vmatpush1.msra.mxu0 0.0
    %219 = vmatprep.subr.mxu0 0.0
    %220 = vmatpush1.msra.mxu0 0.0
    %221 = vmatprep.subr.mxu0 0.0
    %222 = vmatpush1.msra.mxu0 0.0
    %223 = vmatprep.subr.mxu0 0.0
    %224 = vmatpush1.msra.mxu0 0.0
    %225 = vmatprep.subr.mxu0 0.0
    %226 = vmatpush1.msra.mxu0 0.0
    %227 = vmatprep.subr.mxu0 0.0
    %228 = vmatpush1.msra.mxu0 0.0
    %229 = vmatprep.subr.mxu0 0.0
    %230 = vmatpush1.msra.mxu0 0.0
    %231 = vmatprep.subr.mxu0 0.0
    %232 = vmatpush1.msra.mxu0 0.0
    %233 = vmatprep.subr.mxu0 0.0
    %234 = vmatpush1.msra.mxu0 0.0
    %235 = vmatprep.subr.mxu0 0.0
    %236 = vmatpush1.msra.mxu0 0.0
    %237 = vmatprep.subr.mxu0 0.0
    %238 = vmatpush1.msra.mxu0 0.0
    %239 = vmatprep.subr.mxu0 0.0
    %240 = vmatpush1.msra.mxu0 0.0
    %241 = vmatprep.subr.mxu0 0.0
    %242 = vmatpush1.msra.mxu0 0.0
    %243 = vmatprep.mubr.f32.mxu0 0.0
    %244 = vmatmul.mubr.f32.gmra.mrb[0].mxu0 %v177
    %v245 = vpop.f32.mrb[0].mxu0
    %v246 = vadd.f32 0.0, %v245
    %v247 = vpop.f32.mrb[0].mxu0
    %v248 = vadd.f32 0.0, %v247
    %249 = vdwg.mxu0
    %250 = vmatprep.subr.mxu0 %v114
    %251 = vmatpush1.msra.mxu0 %v113
    %252 = vmatprep.subr.mxu0 %v122
    %253 = vmatpush1.msra.mxu0 %v121
    %254 = vmatprep.subr.mxu0 %v130
    %255 = vmatpush1.msra.mxu0 %v129
    %256 = vmatprep.subr.mxu0 %v138
    %257 = vmatpush1.msra.mxu0 %v137
    %258 = vmatprep.subr.mxu0 %v146
    %259 = vmatpush1.msra.mxu0 %v145
    %260 = vmatprep.subr.mxu0 %v154
    %261 = vmatpush1.msra.mxu0 %v153
    %262 = vmatprep.subr.mxu0 %v162
    %263 = vmatpush1.msra.mxu0 %v161
    %264 = vmatprep.subr.mxu0 %v170
    %265 = vmatpush1.msra.mxu0 %v169
    %266 = vmatprep.subr.mxu0 0.0
    %267 = vmatpush1.msra.mxu0 0.0
    %268 = vmatprep.subr.mxu0 0.0
    %269 = vmatpush1.msra.mxu0 0.0
    %270 = vmatprep.subr.mxu0 0.0
    %271 = vmatpush1.msra.mxu0 0.0
    %272 = vmatprep.subr.mxu0 0.0
    %273 = vmatpush1.msra.mxu0 0.0
    %274 = vmatprep.subr.mxu0 0.0
    %275 = vmatpush1.msra.mxu0 0.0
    %276 = vmatprep.subr.mxu0 0.0
    %277 = vmatpush1.msra.mxu0 0.0
    %278 = vmatprep.subr.mxu0 0.0
    %279 = vmatpush1.msra.mxu0 0.0
    %280 = vmatprep.subr.mxu0 0.0
    %281 = vmatpush1.msra.mxu0 0.0
    %282 = vmatprep.subr.mxu0 0.0
    %283 = vmatpush1.msra.mxu0 0.0
    %284 = vmatprep.subr.mxu0 0.0
    %285 = vmatpush1.msra.mxu0 0.0
    %286 = vmatprep.subr.mxu0 0.0
    %287 = vmatpush1.msra.mxu0 0.0
    %288 = vmatprep.subr.mxu0 0.0
    %289 = vmatpush1.msra.mxu0 0.0
    %290 = vmatprep.subr.mxu0 0.0
    %291 = vmatpush1.msra.mxu0 0.0
    %292 = vmatprep.subr.mxu0 0.0
    %293 = vmatpush1.msra.mxu0 0.0
    %294 = vmatprep.subr.mxu0 0.0
    %295 = vmatpush1.msra.mxu0 0.0
    %296 = vmatprep.subr.mxu0 0.0
    %297 = vmatpush1.msra.mxu0 0.0
    %298 = vmatprep.subr.mxu0 0.0
    %299 = vmatpush1.msra.mxu0 0.0
    %300 = vmatprep.subr.mxu0 0.0
    %301 = vmatpush1.msra.mxu0 0.0
    %302 = vmatprep.subr.mxu0 0.0
    %303 = vmatpush1.msra.mxu0 0.0
    %304 = vmatprep.subr.mxu0 0.0
    %305 = vmatpush1.msra.mxu0 0.0
    %306 = vmatprep.subr.mxu0 0.0
    %307 = vmatpush1.msra.mxu0 0.0
    %308 = vmatprep.subr.mxu0 0.0
    %309 = vmatpush1.msra.mxu0 0.0
    %310 = vmatprep.subr.mxu0 0.0
    %311 = vmatpush1.msra.mxu0 0.0
    %312 = vmatprep.subr.mxu0 0.0
    %313 = vmatpush1.msra.mxu0 0.0
    %314 = vmatprep.mubr.f32.mxu0 0.0
    %315 = vmatmul.mubr.f32.gmra.mrb[0].mxu0 %v177
    %v316 = vpop.f32.mrb[0].mxu0
    %v317 = vadd.f32 0.0, %v316
    %v318 = vpop.f32.mrb[0].mxu0
    %v319 = vadd.f32 0.0, %v318
    %320 = vdwg.mxu0
    %321 = vmatprep.subr.mxu0 %v116
    %322 = vmatpush1.msra.mxu0 %v115
    %323 = vmatprep.subr.mxu0 %v124
    %324 = vmatpush1.msra.mxu0 %v123
    %325 = vmatprep.subr.mxu0 %v132
    %326 = vmatpush1.msra.mxu0 %v131
    %327 = vmatprep.subr.mxu0 %v140
    %328 = vmatpush1.msra.mxu0 %v139
    %329 = vmatprep.subr.mxu0 %v148
    %330 = vmatpush1.msra.mxu0 %v147
    %331 = vmatprep.subr.mxu0 %v156
    %332 = vmatpush1.msra.mxu0 %v155
    %333 = vmatprep.subr.mxu0 %v164
    %334 = vmatpush1.msra.mxu0 %v163
    %335 = vmatprep.subr.mxu0 %v172
    %336 = vmatpush1.msra.mxu0 %v171
    %337 = vmatprep.subr.mxu0 0.0
    %338 = vmatpush1.msra.mxu0 0.0
    %339 = vmatprep.subr.mxu0 0.0
    %340 = vmatpush1.msra.mxu0 0.0
    %341 = vmatprep.subr.mxu0 0.0
    %342 = vmatpush1.msra.mxu0 0.0
    %343 = vmatprep.subr.mxu0 0.0
    %344 = vmatpush1.msra.mxu0 0.0
    %345 = vmatprep.subr.mxu0 0.0
    %346 = vmatpush1.msra.mxu0 0.0
    %347 = vmatprep.subr.mxu0 0.0
    %348 = vmatpush1.msra.mxu0 0.0
    %349 = vmatprep.subr.mxu0 0.0
    %350 = vmatpush1.msra.mxu0 0.0
    %351 = vmatprep.subr.mxu0 0.0
    %352 = vmatpush1.msra.mxu0 0.0
    %353 = vmatprep.subr.mxu0 0.0
    %354 = vmatpush1.msra.mxu0 0.0
    %355 = vmatprep.subr.mxu0 0.0
    %356 = vmatpush1.msra.mxu0 0.0
    %357 = vmatprep.subr.mxu0 0.0
    %358 = vmatpush1.msra.mxu0 0.0
    %359 = vmatprep.subr.mxu0 0.0
    %360 = vmatpush1.msra.mxu0 0.0
    %361 = vmatprep.subr.mxu0 0.0
    %362 = vmatpush1.msra.mxu0 0.0
    %363 = vmatprep.subr.mxu0 0.0
    %364 = vmatpush1.msra.mxu0 0.0
    %365 = vmatprep.subr.mxu0 0.0
    %366 = vmatpush1.msra.mxu0 0.0
    %367 = vmatprep.subr.mxu0 0.0
    %368 = vmatpush1.msra.mxu0 0.0
    %369 = vmatprep.subr.mxu0 0.0
    %370 = vmatpush1.msra.mxu0 0.0
    %371 = vmatprep.subr.mxu0 0.0
    %372 = vmatpush1.msra.mxu0 0.0
    %373 = vmatprep.subr.mxu0 0.0
    %374 = vmatpush1.msra.mxu0 0.0
    %375 = vmatprep.subr.mxu0 0.0
    %376 = vmatpush1.msra.mxu0 0.0
    %377 = vmatprep.subr.mxu0 0.0
    %378 = vmatpush1.msra.mxu0 0.0
    %379 = vmatprep.subr.mxu0 0.0
    %380 = vmatpush1.msra.mxu0 0.0
    %381 = vmatprep.subr.mxu0 0.0
    %382 = vmatpush1.msra.mxu0 0.0
    %383 = vmatprep.subr.mxu0 0.0
    %384 = vmatpush1.msra.mxu0 0.0
    %385 = vmatprep.mubr.f32.mxu0 0.0
    %386 = vmatmul.mubr.f32.gmra.mrb[0].mxu0 %v177
    %v387 = vpop.f32.mrb[0].mxu0
    %v388 = vadd.f32 0.0, %v387
    %v389 = vpop.f32.mrb[0].mxu0
    %v390 = vadd.f32 0.0, %v389
    %391 = vdwg.mxu0
    %392 = vmatprep.subr.mxu0 %v118
    %393 = vmatpush1.msra.mxu0 %v117
    %394 = vmatprep.subr.mxu0 %v126
    %395 = vmatpush1.msra.mxu0 %v125
    %396 = vmatprep.subr.mxu0 %v134
    %397 = vmatpush1.msra.mxu0 %v133
    %398 = vmatprep.subr.mxu0 %v142
    %399 = vmatpush1.msra.mxu0 %v141
    %400 = vmatprep.subr.mxu0 %v150
    %401 = vmatpush1.msra.mxu0 %v149
    %402 = vmatprep.subr.mxu0 %v158
    %403 = vmatpush1.msra.mxu0 %v157
    %404 = vmatprep.subr.mxu0 %v166
    %405 = vmatpush1.msra.mxu0 %v165
    %406 = vmatprep.subr.mxu0 %v174
    %407 = vmatpush1.msra.mxu0 %v173
    %408 = vmatprep.subr.mxu0 0.0
    %409 = vmatpush1.msra.mxu0 0.0
    %410 = vmatprep.subr.mxu0 0.0
    %411 = vmatpush1.msra.mxu0 0.0
    %412 = vmatprep.subr.mxu0 0.0
    %413 = vmatpush1.msra.mxu0 0.0
    %414 = vmatprep.subr.mxu0 0.0
    %415 = vmatpush1.msra.mxu0 0.0
    %416 = vmatprep.subr.mxu0 0.0
    %417 = vmatpush1.msra.mxu0 0.0
    %418 = vmatprep.subr.mxu0 0.0
    %419 = vmatpush1.msra.mxu0 0.0
    %420 = vmatprep.subr.mxu0 0.0
    %421 = vmatpush1.msra.mxu0 0.0
    %422 = vmatprep.subr.mxu0 0.0
    %423 = vmatpush1.msra.mxu0 0.0
    %424 = vmatprep.subr.mxu0 0.0
    %425 = vmatpush1.msra.mxu0 0.0
    %426 = vmatprep.subr.mxu0 0.0
    %427 = vmatpush1.msra.mxu0 0.0
    %428 = vmatprep.subr.mxu0 0.0
    %429 = vmatpush1.msra.mxu0 0.0
    %430 = vmatprep.subr.mxu0 0.0
    %431 = vmatpush1.msra.mxu0 0.0
    %432 = vmatprep.subr.mxu0 0.0
    %433 = vmatpush1.msra.mxu0 0.0
    %434 = vmatprep.subr.mxu0 0.0
    %435 = vmatpush1.msra.mxu0 0.0
    %436 = vmatprep.subr.mxu0 0.0
    %437 = vmatpush1.msra.mxu0 0.0
    %438 = vmatprep.subr.mxu0 0.0
    %439 = vmatpush1.msra.mxu0 0.0
    %440 = vmatprep.subr.mxu0 0.0
    %441 = vmatpush1.msra.mxu0 0.0
    %442 = vmatprep.subr.mxu0 0.0
    %443 = vmatpush1.msra.mxu0 0.0
    %444 = vmatprep.subr.mxu0 0.0
    %445 = vmatpush1.msra.mxu0 0.0
    %446 = vmatprep.subr.mxu0 0.0
    %447 = vmatpush1.msra.mxu0 0.0
    %448 = vmatprep.subr.mxu0 0.0
    %449 = vmatpush1.msra.mxu0 0.0
    %450 = vmatprep.subr.mxu0 0.0
    %451 = vmatpush1.msra.mxu0 0.0
    %452 = vmatprep.subr.mxu0 0.0
    %453 = vmatpush1.msra.mxu0 0.0
    %454 = vmatprep.subr.mxu0 0.0
    %455 = vmatpush1.msra.mxu0 0.0
    %456 = vmatprep.mubr.f32.mxu0 0.0
    %457 = vmatmul.mubr.f32.gmra.mrb[0].mxu0 %v177
    %v458 = vpop.f32.mrb[0].mxu0
    %v459 = vadd.f32 0.0, %v458
    %v460 = vpop.f32.mrb[0].mxu0
    %v461 = vadd.f32 0.0, %v460
    %462 = vdwg.mxu0
    %v463 = vld [vmem:[%s3] sm:$0xff]
    %v464 = vld [vmem:[%s3 + $0x8] sm:$0xff]
    %v465 = vld [vmem:[%s3 + $0x10] sm:$0xff]
    %v466 = vld [vmem:[%s3 + $0x18] sm:$0xff]
    %v467 = vld [vmem:[%s3 + $0x20] sm:$0xff]
    %v468 = vld [vmem:[%s3 + $0x28] sm:$0xff]
    %v469 = vld [vmem:[%s3 + $0x30] sm:$0xff]
    %v470 = vld [vmem:[%s3 + $0x38] sm:$0xff]
    %v471 = vld [vmem:[%s3 + $0x40] sm:$0xff]
    %v472 = vld [vmem:[%s3 + $0x48] sm:$0xff]
    %v473 = vld [vmem:[%s3 + $0x50] sm:$0xff]
    %v474 = vld [vmem:[%s3 + $0x58] sm:$0xff]
    %v475 = vld [vmem:[%s3 + $0x60] sm:$0xff]
    %v476 = vld [vmem:[%s3 + $0x68] sm:$0xff]
    %v477 = vld [vmem:[%s3 + $0x70] sm:$0xff]
    %v478 = vld [vmem:[%s3 + $0x78] sm:$0xff]
    %v480 = vsel %vm31, %v28, 0
    %482 = vmatprep.subr.mxu0 %v464
    %483 = vmatpush1.msra.mxu0 %v463
    %484 = vmatprep.subr.mxu0 %v472
    %485 = vmatpush1.msra.mxu0 %v471
    %486 = vmatprep.subr.mxu0 0.0
    %487 = vmatpush1.msra.mxu0 0.0
    %488 = vmatprep.subr.mxu0 0.0
    %489 = vmatpush1.msra.mxu0 0.0
    %490 = vmatprep.subr.mxu0 0.0
    %491 = vmatpush1.msra.mxu0 0.0
    %492 = vmatprep.subr.mxu0 0.0
    %493 = vmatpush1.msra.mxu0 0.0
    %494 = vmatprep.subr.mxu0 0.0
    %495 = vmatpush1.msra.mxu0 0.0
    %496 = vmatprep.subr.mxu0 0.0
    %497 = vmatpush1.msra.mxu0 0.0
    %498 = vmatprep.subr.mxu0 0.0
    %499 = vmatpush1.msra.mxu0 0.0
    %500 = vmatprep.subr.mxu0 0.0
    %501 = vmatpush1.msra.mxu0 0.0
    %502 = vmatprep.subr.mxu0 0.0
    %503 = vmatpush1.msra.mxu0 0.0
    %504 = vmatprep.subr.mxu0 0.0
    %505 = vmatpush1.msra.mxu0 0.0
    %506 = vmatprep.subr.mxu0 0.0
    %507 = vmatpush1.msra.mxu0 0.0
    %508 = vmatprep.subr.mxu0 0.0
    %509 = vmatpush1.msra.mxu0 0.0
    %510 = vmatprep.subr.mxu0 0.0
    %511 = vmatpush1.msra.mxu0 0.0
    %512 = vmatprep.subr.mxu0 0.0
    %513 = vmatpush1.msra.mxu0 0.0
    %514 = vmatprep.subr.mxu0 0.0
    %515 = vmatpush1.msra.mxu0 0.0
    %516 = vmatprep.subr.mxu0 0.0
    %517 = vmatpush1.msra.mxu0 0.0
    %518 = vmatprep.subr.mxu0 0.0
    %519 = vmatpush1.msra.mxu0 0.0
    %520 = vmatprep.subr.mxu0 0.0
    %521 = vmatpush1.msra.mxu0 0.0
    %522 = vmatprep.subr.mxu0 0.0
    %523 = vmatpush1.msra.mxu0 0.0
    %524 = vmatprep.subr.mxu0 0.0
    %525 = vmatpush1.msra.mxu0 0.0
    %526 = vmatprep.subr.mxu0 0.0
    %527 = vmatpush1.msra.mxu0 0.0
    %528 = vmatprep.subr.mxu0 0.0
    %529 = vmatpush1.msra.mxu0 0.0
    %530 = vmatprep.subr.mxu0 0.0
    %531 = vmatpush1.msra.mxu0 0.0
    %532 = vmatprep.subr.mxu0 0.0
    %533 = vmatpush1.msra.mxu0 0.0
    %534 = vmatprep.subr.mxu0 0.0
    %535 = vmatpush1.msra.mxu0 0.0
    %536 = vmatprep.subr.mxu0 0.0
    %537 = vmatpush1.msra.mxu0 0.0
    %538 = vmatprep.subr.mxu0 0.0
    %539 = vmatpush1.msra.mxu0 0.0
    %540 = vmatprep.subr.mxu0 0.0
    %541 = vmatpush1.msra.mxu0 0.0
    %542 = vmatprep.subr.mxu0 0.0
    %543 = vmatpush1.msra.mxu0 0.0
    %544 = vmatprep.subr.mxu0 0.0
    %545 = vmatpush1.msra.mxu0 0.0
    %546 = vmatprep.mubr.f32.mxu0 0.0
    %547 = vmatmul.mubr.f32.gmra.mrb[0].mxu0 %v480
    %v548 = vpop.f32.mrb[0].mxu0
    %v549 = vadd.f32 0.0, %v548
    %v550 = vpop.f32.mrb[0].mxu0
    %v551 = vadd.f32 0.0, %v550
    %552 = vdwg.mxu0
    %553 = vmatprep.subr.mxu0 %v466
    %554 = vmatpush1.msra.mxu0 %v465
    %555 = vmatprep.subr.mxu0 %v474
    %556 = vmatpush1.msra.mxu0 %v473
    %557 = vmatprep.subr.mxu0 0.0
    %558 = vmatpush1.msra.mxu0 0.0
    %559 = vmatprep.subr.mxu0 0.0
    %560 = vmatpush1.msra.mxu0 0.0
    %561 = vmatprep.subr.mxu0 0.0
    %562 = vmatpush1.msra.mxu0 0.0
    %563 = vmatprep.subr.mxu0 0.0
    %564 = vmatpush1.msra.mxu0 0.0
    %565 = vmatprep.subr.mxu0 0.0
    %566 = vmatpush1.msra.mxu0 0.0
    %567 = vmatprep.subr.mxu0 0.0
    %568 = vmatpush1.msra.mxu0 0.0
    %569 = vmatprep.subr.mxu0 0.0
    %570 = vmatpush1.msra.mxu0 0.0
    %571 = vmatprep.subr.mxu0 0.0
    %572 = vmatpush1.msra.mxu0 0.0
    %573 = vmatprep.subr.mxu0 0.0
    %574 = vmatpush1.msra.mxu0 0.0
    %575 = vmatprep.subr.mxu0 0.0
    %576 = vmatpush1.msra.mxu0 0.0
    %577 = vmatprep.subr.mxu0 0.0
    %578 = vmatpush1.msra.mxu0 0.0
    %579 = vmatprep.subr.mxu0 0.0
    %580 = vmatpush1.msra.mxu0 0.0
    %581 = vmatprep.subr.mxu0 0.0
    %582 = vmatpush1.msra.mxu0 0.0
    %583 = vmatprep.subr.mxu0 0.0
    %584 = vmatpush1.msra.mxu0 0.0
    %585 = vmatprep.subr.mxu0 0.0
    %586 = vmatpush1.msra.mxu0 0.0
    %587 = vmatprep.subr.mxu0 0.0
    %588 = vmatpush1.msra.mxu0 0.0
    %589 = vmatprep.subr.mxu0 0.0
    %590 = vmatpush1.msra.mxu0 0.0
    %591 = vmatprep.subr.mxu0 0.0
    %592 = vmatpush1.msra.mxu0 0.0
    %593 = vmatprep.subr.mxu0 0.0
    %594 = vmatpush1.msra.mxu0 0.0
    %595 = vmatprep.subr.mxu0 0.0
    %596 = vmatpush1.msra.mxu0 0.0
    %597 = vmatprep.subr.mxu0 0.0
    %598 = vmatpush1.msra.mxu0 0.0
    %599 = vmatprep.subr.mxu0 0.0
    %600 = vmatpush1.msra.mxu0 0.0
    %601 = vmatprep.subr.mxu0 0.0
    %602 = vmatpush1.msra.mxu0 0.0
    %603 = vmatprep.subr.mxu0 0.0
    %604 = vmatpush1.msra.mxu0 0.0
    %605 = vmatprep.subr.mxu0 0.0
    %606 = vmatpush1.msra.mxu0 0.0
    %607 = vmatprep.subr.mxu0 0.0
    %608 = vmatpush1.msra.mxu0 0.0
    %609 = vmatprep.subr.mxu0 0.0
    %610 = vmatpush1.msra.mxu0 0.0
    %611 = vmatprep.subr.mxu0 0.0
    %612 = vmatpush1.msra.mxu0 0.0
    %613 = vmatprep.subr.mxu0 0.0
    %614 = vmatpush1.msra.mxu0 0.0
    %615 = vmatprep.subr.mxu0 0.0
    %616 = vmatpush1.msra.mxu0 0.0
    %617 = vmatprep.mubr.f32.mxu0 0.0
    %618 = vmatmul.mubr.f32.gmra.mrb[0].mxu0 %v480
    %v619 = vpop.f32.mrb[0].mxu0
    %v620 = vadd.f32 0.0, %v619
    %v621 = vpop.f32.mrb[0].mxu0
    %v622 = vadd.f32 0.0, %v621
    %623 = vdwg.mxu0
    %624 = vmatprep.subr.mxu0 %v468
    %625 = vmatpush1.msra.mxu0 %v467
    %626 = vmatprep.subr.mxu0 %v476
    %627 = vmatpush1.msra.mxu0 %v475
    %628 = vmatprep.subr.mxu0 0.0
    %629 = vmatpush1.msra.mxu0 0.0
    %630 = vmatprep.subr.mxu0 0.0
    %631 = vmatpush1.msra.mxu0 0.0
    %632 = vmatprep.subr.mxu0 0.0
    %633 = vmatpush1.msra.mxu0 0.0
    %634 = vmatprep.subr.mxu0 0.0
    %635 = vmatpush1.msra.mxu0 0.0
    %636 = vmatprep.subr.mxu0 0.0
    %637 = vmatpush1.msra.mxu0 0.0
    %638 = vmatprep.subr.mxu0 0.0
    %639 = vmatpush1.msra.mxu0 0.0
    %640 = vmatprep.subr.mxu0 0.0
    %641 = vmatpush1.msra.mxu0 0.0
    %642 = vmatprep.subr.mxu0 0.0
    %643 = vmatpush1.msra.mxu0 0.0
    %644 = vmatprep.subr.mxu0 0.0
    %645 = vmatpush1.msra.mxu0 0.0
    %646 = vmatprep.subr.mxu0 0.0
    %647 = vmatpush1.msra.mxu0 0.0
    %648 = vmatprep.subr.mxu0 0.0
    %649 = vmatpush1.msra.mxu0 0.0
    %650 = vmatprep.subr.mxu0 0.0
    %651 = vmatpush1.msra.mxu0 0.0
    %652 = vmatprep.subr.mxu0 0.0
    %653 = vmatpush1.msra.mxu0 0.0
    %654 = vmatprep.subr.mxu0 0.0
    %655 = vmatpush1.msra.mxu0 0.0
    %656 = vmatprep.subr.mxu0 0.0
    %657 = vmatpush1.msra.mxu0 0.0
    %658 = vmatprep.subr.mxu0 0.0
    %659 = vmatpush1.msra.mxu0 0.0
    %660 = vmatprep.subr.mxu0 0.0
    %661 = vmatpush1.msra.mxu0 0.0
    %662 = vmatprep.subr.mxu0 0.0
    %663 = vmatpush1.msra.mxu0 0.0
    %664 = vmatprep.subr.mxu0 0.0
    %665 = vmatpush1.msra.mxu0 0.0
    %666 = vmatprep.subr.mxu0 0.0
    %667 = vmatpush1.msra.mxu0 0.0
    %668 = vmatprep.subr.mxu0 0.0
    %669 = vmatpush1.msra.mxu0 0.0
    %670 = vmatprep.subr.mxu0 0.0
    %671 = vmatpush1.msra.mxu0 0.0
    %672 = vmatprep.subr.mxu0 0.0
    %673 = vmatpush1.msra.mxu0 0.0
    %674 = vmatprep.subr.mxu0 0.0
    %675 = vmatpush1.msra.mxu0 0.0
    %676 = vmatprep.subr.mxu0 0.0
    %677 = vmatpush1.msra.mxu0 0.0
    %678 = vmatprep.subr.mxu0 0.0
    %679 = vmatpush1.msra.mxu0 0.0
    %680 = vmatprep.subr.mxu0 0.0
    %681 = vmatpush1.msra.mxu0 0.0
    %682 = vmatprep.subr.mxu0 0.0
    %683 = vmatpush1.msra.mxu0 0.0
    %684 = vmatprep.subr.mxu0 0.0
    %685 = vmatpush1.msra.mxu0 0.0
    %686 = vmatprep.subr.mxu0 0.0
    %687 = vmatpush1.msra.mxu0 0.0
    %688 = vmatprep.mubr.f32.mxu0 0.0
    %689 = vmatmul.mubr.f32.gmra.mrb[0].mxu0 %v480
    %v690 = vpop.f32.mrb[0].mxu0
    %v691 = vadd.f32 0.0, %v690
    %v692 = vpop.f32.mrb[0].mxu0
    %v693 = vadd.f32 0.0, %v692
    %694 = vdwg.mxu0
    %695 = vmatprep.subr.mxu0 %v470
    %696 = vmatpush1.msra.mxu0 %v469
    %697 = vmatprep.subr.mxu0 %v478
    %698 = vmatpush1.msra.mxu0 %v477
    %699 = vmatprep.subr.mxu0 0.0
    %700 = vmatpush1.msra.mxu0 0.0
    %701 = vmatprep.subr.mxu0 0.0
    %702 = vmatpush1.msra.mxu0 0.0
    %703 = vmatprep.subr.mxu0 0.0
    %704 = vmatpush1.msra.mxu0 0.0
    %705 = vmatprep.subr.mxu0 0.0
    %706 = vmatpush1.msra.mxu0 0.0
    %707 = vmatprep.subr.mxu0 0.0
    %708 = vmatpush1.msra.mxu0 0.0
    %709 = vmatprep.subr.mxu0 0.0
    %710 = vmatpush1.msra.mxu0 0.0
    %711 = vmatprep.subr.mxu0 0.0
    %712 = vmatpush1.msra.mxu0 0.0
    %713 = vmatprep.subr.mxu0 0.0
    %714 = vmatpush1.msra.mxu0 0.0
    %715 = vmatprep.subr.mxu0 0.0
    %716 = vmatpush1.msra.mxu0 0.0
    %717 = vmatprep.subr.mxu0 0.0
    %718 = vmatpush1.msra.mxu0 0.0
    %719 = vmatprep.subr.mxu0 0.0
    %720 = vmatpush1.msra.mxu0 0.0
    %721 = vmatprep.subr.mxu0 0.0
    %722 = vmatpush1.msra.mxu0 0.0
    %723 = vmatprep.subr.mxu0 0.0
    %724 = vmatpush1.msra.mxu0 0.0
    %725 = vmatprep.subr.mxu0 0.0
    %726 = vmatpush1.msra.mxu0 0.0
    %727 = vmatprep.subr.mxu0 0.0
    %728 = vmatpush1.msra.mxu0 0.0
    %729 = vmatprep.subr.mxu0 0.0
    %730 = vmatpush1.msra.mxu0 0.0
    %731 = vmatprep.subr.mxu0 0.0
    %732 = vmatpush1.msra.mxu0 0.0
    %733 = vmatprep.subr.mxu0 0.0
    %734 = vmatpush1.msra.mxu0 0.0
    %735 = vmatprep.subr.mxu0 0.0
    %736 = vmatpush1.msra.mxu0 0.0
    %737 = vmatprep.subr.mxu0 0.0
    %738 = vmatpush1.msra.mxu0 0.0
    %739 = vmatprep.subr.mxu0 0.0
    %740 = vmatpush1.msra.mxu0 0.0
    %741 = vmatprep.subr.mxu0 0.0
    %742 = vmatpush1.msra.mxu0 0.0
    %743 = vmatprep.subr.mxu0 0.0
    %744 = vmatpush1.msra.mxu0 0.0
    %745 = vmatprep.subr.mxu0 0.0
    %746 = vmatpush1.msra.mxu0 0.0
    %747 = vmatprep.subr.mxu0 0.0
    %748 = vmatpush1.msra.mxu0 0.0
    %749 = vmatprep.subr.mxu0 0.0
    %750 = vmatpush1.msra.mxu0 0.0
    %751 = vmatprep.subr.mxu0 0.0
    %752 = vmatpush1.msra.mxu0 0.0
    %753 = vmatprep.subr.mxu0 0.0
    %754 = vmatpush1.msra.mxu0 0.0
    %755 = vmatprep.subr.mxu0 0.0
    %756 = vmatpush1.msra.mxu0 0.0
    %757 = vmatprep.subr.mxu0 0.0
    %758 = vmatpush1.msra.mxu0 0.0
    %759 = vmatprep.mubr.f32.mxu0 0.0
    %760 = vmatmul.mubr.f32.gmra.mrb[0].mxu0 %v480
    %v761 = vpop.f32.mrb[0].mxu0
    %v762 = vadd.f32 0.0, %v761
    %v763 = vpop.f32.mrb[0].mxu0
    %v764 = vadd.f32 0.0, %v763
    %765 = vdwg.mxu0
    %v766 = vmul.f32 %v549, %v246
    %v767 = vmul.f32 %v551, %v248
    %v768 = vmul.f32 %v620, %v317
    %v769 = vmul.f32 %v622, %v319
    %v770 = vmul.f32 %v691, %v388
    %v771 = vmul.f32 %v693, %v390
    %v772 = vmul.f32 %v762, %v459
    %v773 = vmul.f32 %v764, %v461
    %v774 = vld [vmem:[%s5] sm:$0xff]
    %v775 = vld [vmem:[%s5 + $0x8] sm:$0xff]
    %v776 = vld [vmem:[%s5 + $0x10] sm:$0xff]
    %v777 = vld [vmem:[%s5 + $0x18] sm:$0xff]
    %v778 = vld [vmem:[%s5 + $0x20] sm:$0xff]
    %v779 = vld [vmem:[%s5 + $0x28] sm:$0xff]
    %v780 = vld [vmem:[%s5 + $0x30] sm:$0xff]
    %v781 = vld [vmem:[%s5 + $0x38] sm:$0xff]
    %v782 = vld [vmem:[%s5 + $0x40] sm:$0xff]
    %v783 = vld [vmem:[%s5 + $0x48] sm:$0xff]
    %v784 = vld [vmem:[%s5 + $0x50] sm:$0xff]
    %v785 = vld [vmem:[%s5 + $0x58] sm:$0xff]
    %v786 = vld [vmem:[%s5 + $0x60] sm:$0xff]
    %v787 = vld [vmem:[%s5 + $0x68] sm:$0xff]
    %v788 = vld [vmem:[%s5 + $0x70] sm:$0xff]
    %v789 = vld [vmem:[%s5 + $0x78] sm:$0xff]
    %v790 = vld [vmem:[%s5 + $0x80] sm:$0xff]
    %v791 = vld [vmem:[%s5 + $0x88] sm:$0xff]
    %v792 = vld [vmem:[%s5 + $0x90] sm:$0xff]
    %v793 = vld [vmem:[%s5 + $0x98] sm:$0xff]
    %v794 = vld [vmem:[%s5 + $0xa0] sm:$0xff]
    %v795 = vld [vmem:[%s5 + $0xa8] sm:$0xff]
    %v796 = vld [vmem:[%s5 + $0xb0] sm:$0xff]
    %v797 = vld [vmem:[%s5 + $0xb8] sm:$0xff]
    %v798 = vld [vmem:[%s5 + $0xc0] sm:$0xff]
    %v799 = vld [vmem:[%s5 + $0xc8] sm:$0xff]
    %v800 = vld [vmem:[%s5 + $0xd0] sm:$0xff]
    %v801 = vld [vmem:[%s5 + $0xd8] sm:$0xff]
    %v802 = vld [vmem:[%s5 + $0xe0] sm:$0xff]
    %v803 = vld [vmem:[%s5 + $0xe8] sm:$0xff]
    %v804 = vld [vmem:[%s5 + $0xf0] sm:$0xff]
    %v805 = vld [vmem:[%s5 + $0xf8] sm:$0xff]
    %v806 = vld [vmem:[%s5 + $0x100] sm:$0xff]
    %v807 = vld [vmem:[%s5 + $0x108] sm:$0xff]
    %v808 = vld [vmem:[%s5 + $0x110] sm:$0xff]
    %v809 = vld [vmem:[%s5 + $0x118] sm:$0xff]
    %v810 = vld [vmem:[%s5 + $0x120] sm:$0xff]
    %v811 = vld [vmem:[%s5 + $0x128] sm:$0xff]
    %v812 = vld [vmem:[%s5 + $0x130] sm:$0xff]
    %v813 = vld [vmem:[%s5 + $0x138] sm:$0xff]
    %v814 = vld [vmem:[%s5 + $0x140] sm:$0xff]
    %v815 = vld [vmem:[%s5 + $0x148] sm:$0xff]
    %v816 = vld [vmem:[%s5 + $0x150] sm:$0xff]
    %v817 = vld [vmem:[%s5 + $0x158] sm:$0xff]
    %v818 = vld [vmem:[%s5 + $0x160] sm:$0xff]
    %v819 = vld [vmem:[%s5 + $0x168] sm:$0xff]
    %v820 = vld [vmem:[%s5 + $0x170] sm:$0xff]
    %v821 = vld [vmem:[%s5 + $0x178] sm:$0xff]
    %v822 = vld [vmem:[%s5 + $0x180] sm:$0xff]
    %v823 = vld [vmem:[%s5 + $0x188] sm:$0xff]
    %v824 = vld [vmem:[%s5 + $0x190] sm:$0xff]
    %v825 = vld [vmem:[%s5 + $0x198] sm:$0xff]
    %v826 = vld [vmem:[%s5 + $0x1a0] sm:$0xff]
    %v827 = vld [vmem:[%s5 + $0x1a8] sm:$0xff]
    %v828 = vld [vmem:[%s5 + $0x1b0] sm:$0xff]
    %v829 = vld [vmem:[%s5 + $0x1b8] sm:$0xff]
    %v830 = vld [vmem:[%s5 + $0x1c0] sm:$0xff]
    %v831 = vld [vmem:[%s5 + $0x1c8] sm:$0xff]
    %v832 = vld [vmem:[%s5 + $0x1d0] sm:$0xff]
    %v833 = vld [vmem:[%s5 + $0x1d8] sm:$0xff]
    %v834 = vld [vmem:[%s5 + $0x1e0] sm:$0xff]
    %v835 = vld [vmem:[%s5 + $0x1e8] sm:$0xff]
    %v836 = vld [vmem:[%s5 + $0x1f0] sm:$0xff]
    %v837 = vld [vmem:[%s5 + $0x1f8] sm:$0xff]
    %v838 = vld [vmem:[%s5 + $0x200] sm:$0xff]
    %v839 = vld [vmem:[%s5 + $0x208] sm:$0xff]
    %v840 = vld [vmem:[%s5 + $0x210] sm:$0xff]
    %v841 = vld [vmem:[%s5 + $0x218] sm:$0xff]
    %v842 = vld [vmem:[%s5 + $0x220] sm:$0xff]
    %v843 = vld [vmem:[%s5 + $0x228] sm:$0xff]
    %v844 = vld [vmem:[%s5 + $0x230] sm:$0xff]
    %v845 = vld [vmem:[%s5 + $0x238] sm:$0xff]
    %v846 = vld [vmem:[%s5 + $0x240] sm:$0xff]
    %v847 = vld [vmem:[%s5 + $0x248] sm:$0xff]
    %v848 = vld [vmem:[%s5 + $0x250] sm:$0xff]
    %v849 = vld [vmem:[%s5 + $0x258] sm:$0xff]
    %v850 = vld [vmem:[%s5 + $0x260] sm:$0xff]
    %v851 = vld [vmem:[%s5 + $0x268] sm:$0xff]
    %v852 = vld [vmem:[%s5 + $0x270] sm:$0xff]
    %v853 = vld [vmem:[%s5 + $0x278] sm:$0xff]
    %v854 = vld [vmem:[%s5 + $0x280] sm:$0xff]
    %v855 = vld [vmem:[%s5 + $0x288] sm:$0xff]
    %v856 = vld [vmem:[%s5 + $0x290] sm:$0xff]
    %v857 = vld [vmem:[%s5 + $0x298] sm:$0xff]
    %v858 = vld [vmem:[%s5 + $0x2a0] sm:$0xff]
    %v859 = vld [vmem:[%s5 + $0x2a8] sm:$0xff]
    %v860 = vld [vmem:[%s5 + $0x2b0] sm:$0xff]
    %v861 = vld [vmem:[%s5 + $0x2b8] sm:$0xff]
    %v862 = vld [vmem:[%s5 + $0x2c0] sm:$0xff]
    %v863 = vld [vmem:[%s5 + $0x2c8] sm:$0xff]
    %v864 = vld [vmem:[%s5 + $0x2d0] sm:$0xff]
    %v865 = vld [vmem:[%s5 + $0x2d8] sm:$0xff]
    %v866 = vld [vmem:[%s5 + $0x2e0] sm:$0xff]
    %v867 = vld [vmem:[%s5 + $0x2e8] sm:$0xff]
    %v868 = vld [vmem:[%s5 + $0x2f0] sm:$0xff]
    %v869 = vld [vmem:[%s5 + $0x2f8] sm:$0xff]
    %v870 = vld [vmem:[%s5 + $0x300] sm:$0xff]
    %v871 = vld [vmem:[%s5 + $0x308] sm:$0xff]
    %v872 = vld [vmem:[%s5 + $0x310] sm:$0xff]
    %v873 = vld [vmem:[%s5 + $0x318] sm:$0xff]
    %v874 = vld [vmem:[%s5 + $0x320] sm:$0xff]
    %v875 = vld [vmem:[%s5 + $0x328] sm:$0xff]
    %v876 = vld [vmem:[%s5 + $0x330] sm:$0xff]
    %v877 = vld [vmem:[%s5 + $0x338] sm:$0xff]
    %v878 = vld [vmem:[%s5 + $0x340] sm:$0xff]
    %v879 = vld [vmem:[%s5 + $0x348] sm:$0xff]
    %v880 = vld [vmem:[%s5 + $0x350] sm:$0xff]
    %v881 = vld [vmem:[%s5 + $0x358] sm:$0xff]
    %v882 = vld [vmem:[%s5 + $0x360] sm:$0xff]
    %v883 = vld [vmem:[%s5 + $0x368] sm:$0xff]
    %v884 = vld [vmem:[%s5 + $0x370] sm:$0xff]
    %v885 = vld [vmem:[%s5 + $0x378] sm:$0xff]
    %v886 = vld [vmem:[%s5 + $0x380] sm:$0xff]
    %v887 = vld [vmem:[%s5 + $0x388] sm:$0xff]
    %v888 = vld [vmem:[%s5 + $0x390] sm:$0xff]
    %v889 = vld [vmem:[%s5 + $0x398] sm:$0xff]
    %v890 = vld [vmem:[%s5 + $0x3a0] sm:$0xff]
    %v891 = vld [vmem:[%s5 + $0x3a8] sm:$0xff]
    %v892 = vld [vmem:[%s5 + $0x3b0] sm:$0xff]
    %v893 = vld [vmem:[%s5 + $0x3b8] sm:$0xff]
    %v894 = vld [vmem:[%s5 + $0x3c0] sm:$0xff]
    %v895 = vld [vmem:[%s5 + $0x3c8] sm:$0xff]
    %v896 = vld [vmem:[%s5 + $0x3d0] sm:$0xff]
    %v897 = vld [vmem:[%s5 + $0x3d8] sm:$0xff]
    %v898 = vld [vmem:[%s5 + $0x3e0] sm:$0xff]
    %v899 = vld [vmem:[%s5 + $0x3e8] sm:$0xff]
    %v900 = vld [vmem:[%s5 + $0x3f0] sm:$0xff]
    %v901 = vld [vmem:[%s5 + $0x3f8] sm:$0xff]
    %902 = vmatprep.subr.mxu0 0.0
    %903 = vmatpush1.msra.mxu0 %v774
    %904 = vmatprep.subr.mxu0 0.0
    %905 = vmatpush1.msra.mxu0 %v775
    %906 = vmatprep.subr.mxu0 0.0
    %907 = vmatpush1.msra.mxu0 %v776
    %908 = vmatprep.subr.mxu0 0.0
    %909 = vmatpush1.msra.mxu0 %v777
    %910 = vmatprep.subr.mxu0 0.0
    %911 = vmatpush1.msra.mxu0 %v778
    %912 = vmatprep.subr.mxu0 0.0
    %913 = vmatpush1.msra.mxu0 %v779
    %914 = vmatprep.subr.mxu0 0.0
    %915 = vmatpush1.msra.mxu0 %v780
    %916 = vmatprep.subr.mxu0 0.0
    %917 = vmatpush1.msra.mxu0 %v781
    %918 = vmatprep.subr.mxu0 0.0
    %919 = vmatpush1.msra.mxu0 %v782
    %920 = vmatprep.subr.mxu0 0.0
    %921 = vmatpush1.msra.mxu0 %v783
    %922 = vmatprep.subr.mxu0 0.0
    %923 = vmatpush1.msra.mxu0 %v784
    %924 = vmatprep.subr.mxu0 0.0
    %925 = vmatpush1.msra.mxu0 %v785
    %926 = vmatprep.subr.mxu0 0.0
    %927 = vmatpush1.msra.mxu0 %v786
    %928 = vmatprep.subr.mxu0 0.0
    %929 = vmatpush1.msra.mxu0 %v787
    %930 = vmatprep.subr.mxu0 0.0
    %931 = vmatpush1.msra.mxu0 %v788
    %932 = vmatprep.subr.mxu0 0.0
    %933 = vmatpush1.msra.mxu0 %v789
    %934 = vmatprep.subr.mxu0 0.0
    %935 = vmatpush1.msra.mxu0 %v790
    %936 = vmatprep.subr.mxu0 0.0
    %937 = vmatpush1.msra.mxu0 %v791
    %938 = vmatprep.subr.mxu0 0.0
    %939 = vmatpush1.msra.mxu0 %v792
    %940 = vmatprep.subr.mxu0 0.0
    %941 = vmatpush1.msra.mxu0 %v793
    %942 = vmatprep.subr.mxu0 0.0
    %943 = vmatpush1.msra.mxu0 %v794
    %944 = vmatprep.subr.mxu0 0.0
    %945 = vmatpush1.msra.mxu0 %v795
    %946 = vmatprep.subr.mxu0 0.0
    %947 = vmatpush1.msra.mxu0 %v796
    %948 = vmatprep.subr.mxu0 0.0
    %949 = vmatpush1.msra.mxu0 %v797
    %950 = vmatprep.subr.mxu0 0.0
    %951 = vmatpush1.msra.mxu0 %v798
    %952 = vmatprep.subr.mxu0 0.0
    %953 = vmatpush1.msra.mxu0 %v799
    %954 = vmatprep.subr.mxu0 0.0
    %955 = vmatpush1.msra.mxu0 %v800
    %956 = vmatprep.subr.mxu0 0.0
    %957 = vmatpush1.msra.mxu0 %v801
    %958 = vmatprep.subr.mxu0 0.0
    %959 = vmatpush1.msra.mxu0 %v802
    %960 = vmatprep.subr.mxu0 0.0
    %961 = vmatpush1.msra.mxu0 %v803
    %962 = vmatprep.subr.mxu0 0.0
    %963 = vmatpush1.msra.mxu0 %v804
    %964 = vmatprep.subr.mxu0 0.0
    %965 = vmatpush1.msra.mxu0 %v805
    %966 = vmatprep.mubr.f32.mxu0 %v767
    %967 = vmatmul.mubr.f32.gmra.mrb[0].mxu0 %v766
    %v968 = vpop.f32.mrb[0].mxu0
    %v969 = vadd.f32 0.0, %v968
    %v970 = vpop.f32.mrb[0].mxu0
    %971 = vdwg.mxu0
    %972 = vmatprep.subr.mxu0 0.0
    %973 = vmatpush1.msra.mxu0 %v806
    %974 = vmatprep.subr.mxu0 0.0
    %975 = vmatpush1.msra.mxu0 %v807
    %976 = vmatprep.subr.mxu0 0.0
    %977 = vmatpush1.msra.mxu0 %v808
    %978 = vmatprep.subr.mxu0 0.0
    %979 = vmatpush1.msra.mxu0 %v809
    %980 = vmatprep.subr.mxu0 0.0
    %981 = vmatpush1.msra.mxu0 %v810
    %982 = vmatprep.subr.mxu0 0.0
    %983 = vmatpush1.msra.mxu0 %v811
    %984 = vmatprep.subr.mxu0 0.0
    %985 = vmatpush1.msra.mxu0 %v812
    %986 = vmatprep.subr.mxu0 0.0
    %987 = vmatpush1.msra.mxu0 %v813
    %988 = vmatprep.subr.mxu0 0.0
    %989 = vmatpush1.msra.mxu0 %v814
    %990 = vmatprep.subr.mxu0 0.0
    %991 = vmatpush1.msra.mxu0 %v815
    %992 = vmatprep.subr.mxu0 0.0
    %993 = vmatpush1.msra.mxu0 %v816
    %994 = vmatprep.subr.mxu0 0.0
    %995 = vmatpush1.msra.mxu0 %v817
    %996 = vmatprep.subr.mxu0 0.0
    %997 = vmatpush1.msra.mxu0 %v818
    %998 = vmatprep.subr.mxu0 0.0
    %999 = vmatpush1.msra.mxu0 %v819
    %1000 = vmatprep.subr.mxu0 0.0
    %1001 = vmatpush1.msra.mxu0 %v820
    %1002 = vmatprep.subr.mxu0 0.0
    %1003 = vmatpush1.msra.mxu0 %v821
    %1004 = vmatprep.subr.mxu0 0.0
    %1005 = vmatpush1.msra.mxu0 %v822
    %1006 = vmatprep.subr.mxu0 0.0
    %1007 = vmatpush1.msra.mxu0 %v823
    %1008 = vmatprep.subr.mxu0 0.0
    %1009 = vmatpush1.msra.mxu0 %v824
    %1010 = vmatprep.subr.mxu0 0.0
    %1011 = vmatpush1.msra.mxu0 %v825
    %1012 = vmatprep.subr.mxu0 0.0
    %1013 = vmatpush1.msra.mxu0 %v826
    %1014 = vmatprep.subr.mxu0 0.0
    %1015 = vmatpush1.msra.mxu0 %v827
    %1016 = vmatprep.subr.mxu0 0.0
    %1017 = vmatpush1.msra.mxu0 %v828
    %1018 = vmatprep.subr.mxu0 0.0
    %1019 = vmatpush1.msra.mxu0 %v829
    %1020 = vmatprep.subr.mxu0 0.0
    %1021 = vmatpush1.msra.mxu0 %v830
    %1022 = vmatprep.subr.mxu0 0.0
    %1023 = vmatpush1.msra.mxu0 %v831
    %1024 = vmatprep.subr.mxu0 0.0
    %1025 = vmatpush1.msra.mxu0 %v832
    %1026 = vmatprep.subr.mxu0 0.0
    %1027 = vmatpush1.msra.mxu0 %v833
    %1028 = vmatprep.subr.mxu0 0.0
    %1029 = vmatpush1.msra.mxu0 %v834
    %1030 = vmatprep.subr.mxu0 0.0
    %1031 = vmatpush1.msra.mxu0 %v835
    %1032 = vmatprep.subr.mxu0 0.0
    %1033 = vmatpush1.msra.mxu0 %v836
    %1034 = vmatprep.subr.mxu0 0.0
    %1035 = vmatpush1.msra.mxu0 %v837
    %1036 = vmatprep.mubr.f32.mxu0 %v769
    %1037 = vmatmul.mubr.f32.gmra.mrb[0].mxu0 %v768
    %v1038 = vpop.f32.mrb[0].mxu0
    %v1039 = vadd.f32 %v969, %v1038
    %v1040 = vpop.f32.mrb[0].mxu0
    %1041 = vdwg.mxu0
    %1042 = vmatprep.subr.mxu0 0.0
    %1043 = vmatpush1.msra.mxu0 %v838
    %1044 = vmatprep.subr.mxu0 0.0
    %1045 = vmatpush1.msra.mxu0 %v839
    %1046 = vmatprep.subr.mxu0 0.0
    %1047 = vmatpush1.msra.mxu0 %v840
    %1048 = vmatprep.subr.mxu0 0.0
    %1049 = vmatpush1.msra.mxu0 %v841
    %1050 = vmatprep.subr.mxu0 0.0
    %1051 = vmatpush1.msra.mxu0 %v842
    %1052 = vmatprep.subr.mxu0 0.0
    %1053 = vmatpush1.msra.mxu0 %v843
    %1054 = vmatprep.subr.mxu0 0.0
    %1055 = vmatpush1.msra.mxu0 %v844
    %1056 = vmatprep.subr.mxu0 0.0
    %1057 = vmatpush1.msra.mxu0 %v845
    %1058 = vmatprep.subr.mxu0 0.0
    %1059 = vmatpush1.msra.mxu0 %v846
    %1060 = vmatprep.subr.mxu0 0.0
    %1061 = vmatpush1.msra.mxu0 %v847
    %1062 = vmatprep.subr.mxu0 0.0
    %1063 = vmatpush1.msra.mxu0 %v848
    %1064 = vmatprep.subr.mxu0 0.0
    %1065 = vmatpush1.msra.mxu0 %v849
    %1066 = vmatprep.subr.mxu0 0.0
    %1067 = vmatpush1.msra.mxu0 %v850
    %1068 = vmatprep.subr.mxu0 0.0
    %1069 = vmatpush1.msra.mxu0 %v851
    %1070 = vmatprep.subr.mxu0 0.0
    %1071 = vmatpush1.msra.mxu0 %v852
    %1072 = vmatprep.subr.mxu0 0.0
    %1073 = vmatpush1.msra.mxu0 %v853
    %1074 = vmatprep.subr.mxu0 0.0
    %1075 = vmatpush1.msra.mxu0 %v854
    %1076 = vmatprep.subr.mxu0 0.0
    %1077 = vmatpush1.msra.mxu0 %v855
    %1078 = vmatprep.subr.mxu0 0.0
    %1079 = vmatpush1.msra.mxu0 %v856
    %1080 = vmatprep.subr.mxu0 0.0
    %1081 = vmatpush1.msra.mxu0 %v857
    %1082 = vmatprep.subr.mxu0 0.0
    %1083 = vmatpush1.msra.mxu0 %v858
    %1084 = vmatprep.subr.mxu0 0.0
    %1085 = vmatpush1.msra.mxu0 %v859
    %1086 = vmatprep.subr.mxu0 0.0
    %1087 = vmatpush1.msra.mxu0 %v860
    %1088 = vmatprep.subr.mxu0 0.0
    %1089 = vmatpush1.msra.mxu0 %v861
    %1090 = vmatprep.subr.mxu0 0.0
    %1091 = vmatpush1.msra.mxu0 %v862
    %1092 = vmatprep.subr.mxu0 0.0
    %1093 = vmatpush1.msra.mxu0 %v863
    %1094 = vmatprep.subr.mxu0 0.0
    %1095 = vmatpush1.msra.mxu0 %v864
    %1096 = vmatprep.subr.mxu0 0.0
    %1097 = vmatpush1.msra.mxu0 %v865
    %1098 = vmatprep.subr.mxu0 0.0
    %1099 = vmatpush1.msra.mxu0 %v866
    %1100 = vmatprep.subr.mxu0 0.0
    %1101 = vmatpush1.msra.mxu0 %v867
    %1102 = vmatprep.subr.mxu0 0.0
    %1103 = vmatpush1.msra.mxu0 %v868
    %1104 = vmatprep.subr.mxu0 0.0
    %1105 = vmatpush1.msra.mxu0 %v869
    %1106 = vmatprep.mubr.f32.mxu0 %v771
    %1107 = vmatmul.mubr.f32.gmra.mrb[0].mxu0 %v770
    %v1108 = vpop.f32.mrb[0].mxu0
    %v1109 = vadd.f32 %v1039, %v1108
    %v1110 = vpop.f32.mrb[0].mxu0
    %1111 = vdwg.mxu0
    %1112 = vmatprep.subr.mxu0 0.0
    %1113 = vmatpush1.msra.mxu0 %v870
    %1114 = vmatprep.subr.mxu0 0.0
    %1115 = vmatpush1.msra.mxu0 %v871
    %1116 = vmatprep.subr.mxu0 0.0
    %1117 = vmatpush1.msra.mxu0 %v872
    %1118 = vmatprep.subr.mxu0 0.0
    %1119 = vmatpush1.msra.mxu0 %v873
    %1120 = vmatprep.subr.mxu0 0.0
    %1121 = vmatpush1.msra.mxu0 %v874
    %1122 = vmatprep.subr.mxu0 0.0
    %1123 = vmatpush1.msra.mxu0 %v875
    %1124 = vmatprep.subr.mxu0 0.0
    %1125 = vmatpush1.msra.mxu0 %v876
    %1126 = vmatprep.subr.mxu0 0.0
    %1127 = vmatpush1.msra.mxu0 %v877
    %1128 = vmatprep.subr.mxu0 0.0
    %1129 = vmatpush1.msra.mxu0 %v878
    %1130 = vmatprep.subr.mxu0 0.0
    %1131 = vmatpush1.msra.mxu0 %v879
    %1132 = vmatprep.subr.mxu0 0.0
    %1133 = vmatpush1.msra.mxu0 %v880
    %1134 = vmatprep.subr.mxu0 0.0
    %1135 = vmatpush1.msra.mxu0 %v881
    %1136 = vmatprep.subr.mxu0 0.0
    %1137 = vmatpush1.msra.mxu0 %v882
    %1138 = vmatprep.subr.mxu0 0.0
    %1139 = vmatpush1.msra.mxu0 %v883
    %1140 = vmatprep.subr.mxu0 0.0
    %1141 = vmatpush1.msra.mxu0 %v884
    %1142 = vmatprep.subr.mxu0 0.0
    %1143 = vmatpush1.msra.mxu0 %v885
    %1144 = vmatprep.subr.mxu0 0.0
    %1145 = vmatpush1.msra.mxu0 %v886
    %1146 = vmatprep.subr.mxu0 0.0
    %1147 = vmatpush1.msra.mxu0 %v887
    %1148 = vmatprep.subr.mxu0 0.0
    %1149 = vmatpush1.msra.mxu0 %v888
    %1150 = vmatprep.subr.mxu0 0.0
    %1151 = vmatpush1.msra.mxu0 %v889
    %1152 = vmatprep.subr.mxu0 0.0
    %1153 = vmatpush1.msra.mxu0 %v890
    %1154 = vmatprep.subr.mxu0 0.0
    %1155 = vmatpush1.msra.mxu0 %v891
    %1156 = vmatprep.subr.mxu0 0.0
    %1157 = vmatpush1.msra.mxu0 %v892
    %1158 = vmatprep.subr.mxu0 0.0
    %1159 = vmatpush1.msra.mxu0 %v893
    %1160 = vmatprep.subr.mxu0 0.0
    %1161 = vmatpush1.msra.mxu0 %v894
    %1162 = vmatprep.subr.mxu0 0.0
    %1163 = vmatpush1.msra.mxu0 %v895
    %1164 = vmatprep.subr.mxu0 0.0
    %1165 = vmatpush1.msra.mxu0 %v896
    %1166 = vmatprep.subr.mxu0 0.0
    %1167 = vmatpush1.msra.mxu0 %v897
    %1168 = vmatprep.subr.mxu0 0.0
    %1169 = vmatpush1.msra.mxu0 %v898
    %1170 = vmatprep.subr.mxu0 0.0
    %1171 = vmatpush1.msra.mxu0 %v899
    %1172 = vmatprep.subr.mxu0 0.0
    %1173 = vmatpush1.msra.mxu0 %v900
    %1174 = vmatprep.subr.mxu0 0.0
    %1175 = vmatpush1.msra.mxu0 %v901
    %1176 = vmatprep.mubr.f32.mxu0 %v773
    %1177 = vmatmul.mubr.f32.gmra.mrb[0].mxu0 %v772
    %v1178 = vpop.f32.mrb[0].mxu0
    %v1179 = vadd.f32 %v1109, %v1178
    %v1180 = vpop.f32.mrb[0].mxu0
    %1181 = vdwg.mxu0
    %1182 = vst.msk [vmem:[#allocation4] sm:$0xff] %vm106, %v1179
    // Predicated region
    $region26: #{tpu_custom_call.1} parent=1 // pred_check
      _
    $region27: #{tpu_custom_call.1} parent=1 // pred_check_branch
      %1184 = sbr.rel (0) target = $region29
    $region28: #{tpu_custom_call.1} parent=1 // pred_region
      %s1186 = ssub.s32 128, 128
      %1187 = vsyncadd [#allocation3], %s1186
      %s1189 = sshll.u32 [#allocation2], 4
      %s1190 = int_to_ptr.vmem [resolvable:$true] %s1189
      %1192 = dma.vmem_to_hbm [thread:$0]  %s1190, 128, %s6, [#allocation3]
    $region29: #{tpu_custom_call.1} parent=1 // pred_fallthru
      _
    // Predicated region
    $region30: #{tpu_custom_call.1} parent=1 // pred_check
      _
    $region31: #{tpu_custom_call.1} parent=1 // pred_check_branch
      %1194 = sbr.rel (0) target = $region33
    $region32: #{tpu_custom_call.1} parent=1 // pred_region
      %s1196 = ssub.s32 128, 128
      %1197 = vsyncadd [#allocation5], %s1196
      %s1199 = sshll.u32 [#allocation4], 4
      %s1200 = int_to_ptr.vmem [resolvable:$true] %s1199
      %1202 = dma.vmem_to_hbm [thread:$0]  %s1200, 128, %s7, [#allocation5]
    $region33: #{tpu_custom_call.1} parent=1 // pred_fallthru
      _
    // Predicated region
    $region34: #{tpu_custom_call.1} parent=1 // pred_check
      _
    $region35: #{tpu_custom_call.1} parent=1 // pred_check_branch
      %1204 = sbr.rel (0) target = $region37
    $region36: #{tpu_custom_call.1} parent=1 // pred_region
      %1205 = dma.done [#allocation3], 128
    $region37: #{tpu_custom_call.1} parent=1 // pred_fallthru
      _
    // Predicated region
    $region38: #{tpu_custom_call.1} parent=1 // pred_check
      _
    $region39: #{tpu_custom_call.1} parent=1 // pred_check_branch
      %1207 = sbr.rel (0) target = $region41
    $region40: #{tpu_custom_call.1} parent=1 // pred_region
      %1208 = dma.done [#allocation5], 128
    $region41: #{tpu_custom_call.1} parent=1 // pred_fallthru
      _
    %1209 = vsyncpa [#allocation3], 1
    %1210 = vsyncpa [#allocation5], 1

</llo_original>
